<compile_context>
chip_gen: v6e
topology: v6e:2x2x1
jax: 0.10.0
libtpu: 0.0.40
codegen_flags: <defaults>
</compile_context>

<pallas_src>
import functools

import jax
import jax.numpy as jnp
from jax import lax
from jax.experimental import pallas as pl
from jax.experimental.pallas import tpu as pltpu

_NEG_INF = -1e30  # large finite negative: avoids inf-inf NaNs in the online softmax


def _round_up(x: int, m: int) -> int:
    return ((x + m - 1) // m) * m


# ---------------------------------------------------------------------------
# Stage 1: fused linear projections -> per-head (B, H, S, dh) layout.
# ---------------------------------------------------------------------------
def _proj_heads_kernel(*refs, n_w, heads, dim_head, scale):
    # refs = (x_ref, w_ref_0..w_ref_{n_w-1}, o_ref_0..o_ref_{n_w-1})
    # x_ref: (TS, D) compute dtype; w_ref: (D, H*dh); o_ref: (H, TS, dh)
    x_ref = refs[0]
    w_refs = refs[1:1 + n_w]
    o_refs = refs[1 + n_w:1 + 2 * n_w]
    x = x_ref[...]
    for w_ref, o_ref in zip(w_refs, o_refs):
        # One wide (TS, D) @ (D, H*dh) matmul; f32 accumulation.
        proj = jnp.dot(x, w_ref[...], preferred_element_type=jnp.float32)
        if scale != 1.0:
            proj = proj * scale  # softmax scale applied to q in f32 (exact)
        # Per-head slab writes happen ONCE per token tile (not in the attention
        # inner loop), converting the lane-interleaved '(h d)' layout to (H, TS, dh).
        for h in range(heads):
            o_ref[h] = proj[:, h * dim_head:(h + 1) * dim_head].astype(o_ref.dtype)


def _project_to_heads(inp, weights_t, *, heads, dim_head, scale, seq_tile):
    """inp: (B, S_pad, D); weights_t: list of (D, H*dh). Returns tuple of (B,H,S_pad,dh)."""
    B, S, D = inp.shape
    inner = heads * dim_head
    n_w = len(weights_t)
    cbytes = jnp.dtype(inp.dtype).itemsize

    kernel = functools.partial(_proj_heads_kernel, n_w=n_w, heads=heads,
                               dim_head=dim_head, scale=scale)

    in_specs = [pl.BlockSpec((pl.Squeezed(), seq_tile, D), lambda b, s: (b, s, 0))]
    in_specs += [pl.BlockSpec((D, inner), lambda b, s: (0, 0)) for _ in range(n_w)]
    out_specs = [
        pl.BlockSpec((pl.Squeezed(), heads, seq_tile, dim_head),
                     lambda b, s: (b, 0, s, 0))
        for _ in range(n_w)
    ]
    out_shape = [jax.ShapeDtypeStruct((B, heads, S, dim_head), inp.dtype)
                 for _ in range(n_w)]

    outs = pl.pallas_call(
        kernel,
        out_shape=out_shape,
        grid_spec=pltpu.PrefetchScalarGridSpec(
            num_scalar_prefetch=0,
            grid=(B, S // seq_tile),
            in_specs=in_specs,
            out_specs=out_specs,
        ),
        compiler_params=pltpu.CompilerParams(
            dimension_semantics=("parallel", "parallel")),
        cost_estimate=pl.CostEstimate(
            flops=2 * B * S * D * inner * n_w,
            transcendentals=0,
            bytes_accessed=int(cbytes * (B * S * D + n_w * D * inner
                                         + n_w * B * S * inner))),
    )(inp, *weights_t)
    return tuple(outs)


# ---------------------------------------------------------------------------
# Stage 2: flash attention (online softmax) over (batch, q-tile, kv-tile).
# ---------------------------------------------------------------------------
def _flash_attn_kernel(q_ref, k_ref, v_ref, o_ref, m_ref, l_ref, acc_ref, *,
                       kv_len, kv_tile, need_mask):
    # q_ref: (H, TQ, dh); k_ref/v_ref: (H, TK, dh); o_ref: (TQ, H*dh)
    # scratch: m_ref/l_ref (H, TQ, 1) f32, acc_ref (H, TQ, dh) f32
    ki = pl.program_id(2)

    @pl.when(ki == 0)
    def _init():
        m_ref[...] = jnp.full(m_ref.shape, _NEG_INF, dtype=m_ref.dtype)
        l_ref[...] = jnp.zeros(l_ref.shape, dtype=l_ref.dtype)
        acc_ref[...] = jnp.zeros(acc_ref.shape, dtype=acc_ref.dtype)

    q = q_ref[...]
    k = k_ref[...]
    v = v_ref[...]

    # (H, TQ, TK) scores, batched over heads; f32 accumulation on the MXU.
    s = jnp.einsum('hqd,hkd->hqk', q, k, preferred_element_type=jnp.float32)

    if need_mask:  # static: only emitted when M was padded up to a multiple of TK
        kpos = kv_tile * ki + lax.broadcasted_iota(jnp.int32, (1, 1, s.shape[-1]), 2)
        s = jnp.where(kpos < kv_len, s, _NEG_INF)

    m_prev = m_ref[...]
    m_new = jnp.maximum(m_prev, jnp.max(s, axis=-1, keepdims=True))
    alpha = jnp.exp(m_prev - m_new)          # (H, TQ, 1), f32 (EUP)
    p = jnp.exp(s - m_new)                   # (H, TQ, TK), f32 (EUP)

    l_ref[...] = alpha * l_ref[...] + jnp.sum(p, axis=-1, keepdims=True)
    acc_ref[...] = alpha * acc_ref[...] + jnp.einsum(
        'hqk,hkd->hqd', p.astype(v.dtype), v, preferred_element_type=jnp.float32)
    m_ref[...] = m_new

    @pl.when(ki == pl.num_programs(2) - 1)
    def _finalize():
        inv_l = pl.reciprocal(l_ref[...], approx=True)   # EUP, off the VALU path
        out_hd = acc_ref[...] * inv_l                     # (H, TQ, dh) f32
        heads = out_hd.shape[0]
        # One lane-dense (TQ, H*dh) store per query tile (finalize branch only).
        out = jnp.concatenate([out_hd[h] for h in range(heads)], axis=-1)
        o_ref[...] = out.astype(o_ref.dtype)


# ---------------------------------------------------------------------------
# Wrapper: CrossAttention_Spatial.forward (no_toout=True path).
# ---------------------------------------------------------------------------
def cross_attention_spatial(x, wq, wk, wv, *, heads, dim_head, context=None,
                            mask=None, q_tile=256, kv_tile=512,
                            compute_dtype=jnp.bfloat16):
    """x: (B, N, query_dim); wq: (H*dh, query_dim); wk/wv: (H*dh, context_dim).
    Returns (B, N, H*dh) matching the PyTorch module's 'b n (h d)' output."""
    if mask is not None:
        # TODO(synk): boolean key mask (masked_fill path) is not implemented.
        raise NotImplementedError("mask is not supported by the Pallas kernel")
    if context is None:
        context = x

    B, N, Dq = x.shape
    Bc, M, Dc = context.shape
    assert Bc == B
    H, dh = heads, dim_head
    inner = H * dh
    assert wq.shape == (inner, Dq)
    assert wk.shape == (inner, Dc)
    assert wv.shape == (inner, Dc)

    out_dtype = x.dtype
    cdt = jnp.dtype(out_dtype) if compute_dtype is None else jnp.dtype(compute_dtype)
    scale = float(dh) ** -0.5

    # Tile / padding choices (bf16 sublane pack of 16; blocks evenly divide).
    tq = max(16, _round_up(q_tile, 16))
    tk = max(16, _round_up(kv_tile, 16))
    tq = min(tq, _round_up(N, 16))
    tk = min(tk, _round_up(M, 16))
    n_pad = _round_up(N, tq)
    m_pad = _round_up(M, tk)
    need_mask = m_pad != M

    # Pre-transpose nn.Linear weights to (in, out) so kernels never transpose.
    wq_t = wq.T.astype(cdt)   # (Dq, H*dh)
    wk_t = wk.T.astype(cdt)   # (Dc, H*dh)
    wv_t = wv.T.astype(cdt)   # (Dc, H*dh)

    x_p = jnp.pad(x, ((0, 0), (0, n_pad - N), (0, 0))).astype(cdt)
    c_p = jnp.pad(context, ((0, 0), (0, m_pad - M), (0, 0))).astype(cdt)

    # --- Stage 1: projections, computed once (not per (q-tile, kv-tile) pair). ---
    (q_h,) = _project_to_heads(x_p, [wq_t], heads=H, dim_head=dh,
                               scale=scale, seq_tile=tq)
    k_h, v_h = _project_to_heads(c_p, [wk_t, wv_t], heads=H, dim_head=dh,
                                 scale=1.0, seq_tile=tk)

    # --- Stage 2: flash attention. ---
    cbytes = jnp.dtype(cdt).itemsize
    obytes = jnp.dtype(out_dtype).itemsize
    lane_dh = _round_up(dh, 128)
    lane_in = _round_up(inner, 128)
    lane_tk = _round_up(tk, 128)
    vmem_est = (2 * H * (tq + 2 * tk) * lane_dh * cbytes   # dbl-buffered q/k/v tiles
                + 2 * tq * lane_in * obytes                # dbl-buffered out tile
                + H * tq * (lane_dh + 2 * 128) * 4         # acc + m + l scratch
                + 3 * H * tq * lane_tk * 4)                # s / p f32 transients
    vmem_limit = int(min(max(2 * vmem_est, 32 << 20), 64 << 20))

    kernel = functools.partial(_flash_attn_kernel, kv_len=M, kv_tile=tk,
                               need_mask=need_mask)

    out = pl.pallas_call(
        kernel,
        out_shape=jax.ShapeDtypeStruct((B, n_pad, inner), out_dtype),
        grid_spec=pltpu.PrefetchScalarGridSpec(
            num_scalar_prefetch=0,
            grid=(B, n_pad // tq, m_pad // tk),   # kv (reduction) axis last
            in_specs=[
                pl.BlockSpec((pl.Squeezed(), H, tq, dh),
                             lambda b, qi, ki: (b, 0, qi, 0)),   # Q
                pl.BlockSpec((pl.Squeezed(), H, tk, dh),
                             lambda b, qi, ki: (b, 0, ki, 0)),   # K
                pl.BlockSpec((pl.Squeezed(), H, tk, dh),
                             lambda b, qi, ki: (b, 0, ki, 0)),   # V
            ],
            out_specs=pl.BlockSpec((pl.Squeezed(), tq, inner),
                                   lambda b, qi, ki: (b, qi, 0)),
            scratch_shapes=[
                pltpu.VMEM((H, tq, 1), jnp.float32),    # running max m
                pltpu.VMEM((H, tq, 1), jnp.float32),    # running sum l
                pltpu.VMEM((H, tq, dh), jnp.float32),   # output accumulator
            ],
        ),
        compiler_params=pltpu.CompilerParams(
            dimension_semantics=("parallel", "parallel", "arbitrary"),
            vmem_limit_bytes=vmem_limit,
        ),
        cost_estimate=pl.CostEstimate(
            flops=4 * B * H * n_pad * m_pad * dh,
            transcendentals=B * H * n_pad * m_pad,   # exp-dominated at small dh
            bytes_accessed=int(
                cbytes * B * H * dh * (n_pad + 2 * m_pad * (n_pad // tq))
                + obytes * B * n_pad * inner),
        ),
    )(q_h, k_h, v_h)

    return out[:, :N, :]


# ---------------------------------------------------------------------------
# Pure-JAX f32 reference matching the PyTorch module.
# ---------------------------------------------------------------------------
def _reference(x, wq, wk, wv, *, heads, dim_head, context=None):
    if context is None:
        context = x
    B, N, _ = x.shape
    H, dh = heads, dim_head
    q = jnp.einsum("bnc,oc->bno", x, wq)
    k = jnp.einsum("bmc,oc->bmo", context, wk)
    v = jnp.einsum("bmc,oc->bmo", context, wv)
    q = q.reshape(B, N, H, dh).transpose(0, 2, 1, 3)
    k = k.reshape(B, -1, H, dh).transpose(0, 2, 1, 3)
    v = v.reshape(B, -1, H, dh).transpose(0, 2, 1, 3)
    sim = jnp.einsum("bhid,bhjd->bhij", q, k) * (dh ** -0.5)
    attn = jax.nn.softmax(sim, axis=-1)
    out = jnp.einsum("bhij,bhjd->bhid", attn, v)
    return out.transpose(0, 2, 1, 3).reshape(B, N, H * dh)


if __name__ == "__main__":
    key = jax.random.PRNGKey(0)

    # Case 1: tiny self-attention config (query_dim=32, heads=2, dim_head=16).
    B, N, Dq = 2, 8, 32
    heads, dim_head = 2, 16
    inner = heads * dim_head
    kx, kq, kk, kv = jax.random.split(key, 4)
    x = jax.random.normal(kx, (B, N, Dq), dtype=jnp.float32)
    wq = jax.random.normal(kq, (inner, Dq), dtype=jnp.float32) * 0.1
    wk = jax.random.normal(kk, (inner, Dq), dtype=jnp.float32) * 0.1
    wv = jax.random.normal(kv, (inner, Dq), dtype=jnp.float32) * 0.1

    out = cross_attention_spatial(x, wq, wk, wv, heads=heads, dim_head=dim_head)
    out = jax.block_until_ready(out)
    ref = _reference(x, wq, wk, wv, heads=heads, dim_head=dim_head)
    assert out.shape == (B, N, inner)
    assert jnp.allclose(out, ref, atol=2e-2, rtol=2e-2), (
        float(jnp.max(jnp.abs(out - ref))))

    # Case 2: cross-attention with padding + multiple flash query/key tiles.
    B2, N2, M2, Dq2, Dc2 = 2, 72, 100, 32, 48
    h2, d2 = 2, 16
    inner2 = h2 * d2
    k2 = jax.random.split(jax.random.PRNGKey(1), 5)
    x2 = jax.random.normal(k2[0], (B2, N2, Dq2), dtype=jnp.float32)
    c2 = jax.random.normal(k2[1], (B2, M2, Dc2), dtype=jnp.float32)
    wq2 = jax.random.normal(k2[2], (inner2, Dq2), dtype=jnp.float32) * 0.1
    wk2 = jax.random.normal(k2[3], (inner2, Dc2), dtype=jnp.float32) * 0.1
    wv2 = jax.random.normal(k2[4], (inner2, Dc2), dtype=jnp.float32) * 0.1

    out2 = cross_attention_spatial(x2, wq2, wk2, wv2, heads=h2, dim_head=d2,
                                   context=c2, q_tile=32, kv_tile=64)
    out2 = jax.block_until_ready(out2)
    ref2 = _reference(x2, wq2, wk2, wv2, heads=h2, dim_head=d2, context=c2)
    assert out2.shape == (B2, N2, inner2)
    assert jnp.allclose(out2, ref2, atol=2e-2, rtol=2e-2), (
        float(jnp.max(jnp.abs(out2 - ref2))))

    print("KERNEL_OK")
</pallas_src>

<mosaic_0001>
module attributes {stable_mosaic.version = 11 : i64} {
  func.func @_proj_heads_kernel(%arg0: i32, %arg1: i32, %arg2: memref<1x16x32xbf16, #tpu.memory_space<vmem>>, %arg3: memref<32x32xbf16, #tpu.memory_space<vmem>>, %arg4: memref<1x2x16x16xbf16, #tpu.memory_space<vmem>>) attributes {dimension_semantics = [#tpu.dimension_semantics<parallel>, #tpu.dimension_semantics<parallel>], iteration_bounds = array<i64: 2, 1>, scalar_prefetch = 0 : i64, scratch_operands = 0 : i64, tpu.core_type = #tpu.core_type<tc>, window_params = [{transform_indices = @transform_0, window_bounds = array<i64: 1, 16, 32>}, {pipeline_mode = #tpu.pipeline_mode<synchronous>, transform_indices = @transform_1, window_bounds = array<i64: 32, 32>}, {transform_indices = @transform_2, window_bounds = array<i64: 1, 2, 16, 16>}]} {
    %c0 = arith.constant 0 : index
    %c0_0 = arith.constant 0 : index
    %c0_1 = arith.constant 0 : index
    %0 = vector.load %arg2[%c0, %c0_0, %c0_1] : memref<1x16x32xbf16, #tpu.memory_space<vmem>>, vector<1x16x32xbf16>
    %1 = vector.shape_cast %0 : vector<1x16x32xbf16> to vector<16x32xbf16>
    %c0_2 = arith.constant 0 : index
    %c0_3 = arith.constant 0 : index
    %2 = vector.load %arg3[%c0_2, %c0_3] : memref<32x32xbf16, #tpu.memory_space<vmem>>, vector<32x32xbf16>
    %cst = arith.constant dense<0.000000e+00> : vector<16x32xf32>
    %3 = tpu.matmul %1, %2, %cst {dimension_numbers = #tpu.dot_dimension_numbers<[1], [0], [0], [1], [0, 0, 1, 1], [], []>} : vector<16x32xbf16>, vector<32x32xbf16>, vector<16x32xf32> -> vector<16x32xf32>
    %cst_4 = arith.constant 2.500000e-01 : f32
    %4 = vector.broadcast %cst_4 : f32 to vector<16x32xf32>
    %5 = arith.mulf %3, %4 : vector<16x32xf32>
    %6 = vector.extract_strided_slice %5 {offsets = [0, 0], sizes = [16, 16], strides = [1, 1]} : vector<16x32xf32> to vector<16x16xf32>
    %7 = arith.truncf %6 : vector<16x16xf32> to vector<16x16xbf16>
    %c0_5 = arith.constant 0 : index
    %c0_6 = arith.constant 0 : index
    %c0_7 = arith.constant 0 : index
    %c0_8 = arith.constant 0 : index
    %8 = vector.load %arg4[%c0_5, %c0_6, %c0_7, %c0_8] : memref<1x2x16x16xbf16, #tpu.memory_space<vmem>>, vector<1x1x16x16xbf16>
    %9 = vector.shape_cast %8 : vector<1x1x16x16xbf16> to vector<16x16xbf16>
    %10 = vector.shape_cast %7 : vector<16x16xbf16> to vector<1x1x16x16xbf16>
    tpu.vector_store %arg4[%c0_5, %c0_6, %c0_7, %c0_8], %10 {strides = array<i32>} : memref<1x2x16x16xbf16, #tpu.memory_space<vmem>>, vector<1x1x16x16xbf16>,
    %11 = vector.extract_strided_slice %5 {offsets = [0, 16], sizes = [16, 16], strides = [1, 1]} : vector<16x32xf32> to vector<16x16xf32>
    %12 = arith.truncf %11 : vector<16x16xf32> to vector<16x16xbf16>
    %c0_9 = arith.constant 0 : index
    %c1 = arith.constant 1 : index
    %c0_10 = arith.constant 0 : index
    %c0_11 = arith.constant 0 : index
    %13 = vector.load %arg4[%c0_9, %c1, %c0_10, %c0_11] : memref<1x2x16x16xbf16, #tpu.memory_space<vmem>>, vector<1x1x16x16xbf16>
    %14 = vector.shape_cast %13 : vector<1x1x16x16xbf16> to vector<16x16xbf16>
    %15 = vector.shape_cast %12 : vector<16x16xbf16> to vector<1x1x16x16xbf16>
    tpu.vector_store %arg4[%c0_9, %c1, %c0_10, %c0_11], %15 {strides = array<i32>} : memref<1x2x16x16xbf16, #tpu.memory_space<vmem>>, vector<1x1x16x16xbf16>,
    return
  }
  func.func @transform_0(%arg0: i32, %arg1: i32) -> (i32, i32, i32) {
    %c0_i32 = arith.constant 0 : i32
    %c0_i32_0 = arith.constant 0 : i32
    return %arg0, %arg1, %c0_i32 : i32, i32, i32
  }
  func.func @transform_1(%arg0: i32, %arg1: i32) -> (i32, i32) {
    %c0_i32 = arith.constant 0 : i32
    %c0_i32_0 = arith.constant 0 : i32
    %c0_i32_1 = arith.constant 0 : i32
    return %c0_i32, %c0_i32_0 : i32, i32
  }
  func.func @transform_2(%arg0: i32, %arg1: i32) -> (i32, i32, i32, i32) {
    %c0_i32 = arith.constant 0 : i32
    %c0_i32_0 = arith.constant 0 : i32
    %c0_i32_1 = arith.constant 0 : i32
    return %arg0, %c0_i32, %arg1, %c0_i32_0 : i32, i32, i32, i32
  }
}

</mosaic_0001>

<llo_original>
// kernel: tpu_custom_call.1
$region0: #{tpu_custom_call.1}
  #allocation0 [shape = 'u32[]', space=smem, size = 0x4, offset = 0x4, fixed_abs, tag = 'smem constant byte address 0x4 - core index']
  #allocation1 [shape = 'u32[144,128]{1,0:T(1,128)}', space=vmem, size = 0x12000, scoped, tag = 'internal scratch']
  %s0 = inlined_call_operand.hbm [shape: bf16[2,16,32], index: 0, kind: input, shape index: {}]
  %s1 = inlined_call_operand.hbm [shape: bf16[32,32], index: 1, kind: input, shape index: {}]
  %s2 = inlined_call_operand.hbm [shape: bf16[2,2,16,16], index: 2, kind: output, shape index: {}]
  %s3 = sld [smem:[#allocation0]]
  $region49: #{tpu_custom_call.1} parent=0
    _
  %s5 = ssub.s32 1, %s3
  %s6 = scalar_select 0, %s5, %s3
  $region1: #{tpu_custom_call.1} parent=0
    #allocation2 [shape = 'u8[8192]{0}', space=vmem, size = 0x2000, scoped, tag = 'input window, operand 0']
    #allocation3 [shape = 's32[2]{0}', space=sflag, size = 0x8, scoped, tag = 'scoped memory for tpu_custom_call.1']
    #allocation4 [shape = 's32[2]{0}', space=sflag, size = 0x8, scoped, tag = 'scoped memory for tpu_custom_call.1']
    #allocation5 [shape = 'u8[8192]{0}', space=vmem, size = 0x2000, scoped, tag = 'input window, operand 1, single buffered']
    #allocation6 [shape = 's32[1]{0}', space=sflag, size = 0x4, scoped, tag = 'scoped memory for tpu_custom_call.1']
    #allocation7 [shape = 'u8[16384]{0}', space=vmem, size = 0x4000, scoped, tag = 'output window, operand 0']
    %7 = vsyncpa [#allocation3], 0
    %s8 = scalar_lea.sflag [#allocation3], 1
    %9 = vsyncpa %s8, 0
    %10 = vsyncpa [#allocation6], 0
    %11 = vsyncpa [#allocation4], 0
    %s12 = scalar_lea.sflag [#allocation4], 1
    %13 = vsyncpa %s12, 0
    loop: start=0, step=1, limit=4
    $region2: #{tpu_custom_call.1} parent=1 // loop_pre_header
      _
    $region3: #{tpu_custom_call.1} parent=1 // loop_header
      %s15 = sphi 0, %s19
      %p16 = scmp.ge.s32.totalorder %s15, 4
      %s22 = sphi 0, %s34
      %s23 = sphi 0, %s30
      %s24 = sphi 0, %s22
      %s25 = sphi 0, %s23
      %s26 = sphi 0, %s24
      %s27 = sphi 0, %s25
      %s39 = sphi 0, %s41
      %s42 = sphi 0, %s39
      %s43 = sphi 0, %s42
      %s59 = sphi 0, %s43
      %s63 = sphi 0, %s63
      %s65 = sphi 0, %s63
      %s66 = sphi 0, %s65
      %s80 = sphi 0, %s66
      %s88 = sphi 0, %s90
      %s91 = sphi 0, %s88
      %s92 = sphi 0, %s91
      %s108 = sphi 0, %s92
    $region4: #{tpu_custom_call.1} parent=1 // loop_header_branch
      %18 = sbr.rel (%p16) target = $region8
    $region5: #{tpu_custom_call.1} parent=1 // loop_body
      %s20 = ssub.s32 %s15, 1
      %s21 = ssub.s32 %s15, 2
      %s28 = sadd.s32 1, %s23
      %p29 = scmp.ge.s32.totalorder %s28, 1
      %s30 = scalar_select %p29, 0, %s28
      %s31 = sadd.s32 1, %s22
      %s32 = scalar_select %p29, %s31, %s22
      %p33 = scmp.ge.s32.totalorder %s32, 2
      %s34 = scalar_select %p33, 0, %s32
      %s35 = ssub.s32 %s22, %s34
      %s36 = ssub.s32 %s23, %s30
      %s37 = sor.u32 %s35, %s36
      %p38 = scmp.eq.s32.totalorder %s37, 0
      %s40 = sadd.s32 %s39, 1
      %s41 = scalar_select %p38, %s39, %s40
      %p44 = pneg %p38
      %p45 = scmp.eq.s32.totalorder %s15, 1
      %p46 = por %p44, %p45
      %p47 = scmp.ne.s32.totalorder %s39, %s42
      %p48 = scmp.eq.s32.totalorder %s15, 0
      %p49 = por %p47, %p48
      %p50 = scmp.ne.s32.totalorder %s39, %s42
      %p51 = scmp.eq.s32.totalorder %s20, 1
      %p52 = por %p50, %p51
      %p53 = scmp.ne.s32.totalorder %s42, %s43
      %p54 = scmp.eq.s32.totalorder %s20, 0
      %p55 = por %p53, %p54
      %p56 = scmp.ne.s32.totalorder %s42, %s43
      %p57 = scmp.eq.s32.totalorder %s21, 1
      %p58 = por %p56, %p57
      %p60 = scmp.ne.s32.totalorder %s43, %s59
      %p61 = scmp.eq.s32.totalorder %s21, 0
      %p62 = por %p60, %p61
      %s64 = sadd.s32 %s63, 1
      %p67 = scmp.eq.s32.totalorder %s15, 1
      %p68 = scmp.ne.s32.totalorder %s63, %s65
      %p69 = scmp.eq.s32.totalorder %s15, 0
      %p70 = por %p68, %p69
      %p71 = scmp.ne.s32.totalorder %s63, %s65
      %p72 = scmp.eq.s32.totalorder %s20, 1
      %p73 = por %p71, %p72
      %p74 = scmp.ne.s32.totalorder %s65, %s66
      %p75 = scmp.eq.s32.totalorder %s20, 0
      %p76 = por %p74, %p75
      %p77 = scmp.ne.s32.totalorder %s65, %s66
      %p78 = scmp.eq.s32.totalorder %s21, 1
      %p79 = por %p77, %p78
      %p81 = scmp.ne.s32.totalorder %s66, %s80
      %p82 = scmp.eq.s32.totalorder %s21, 0
      %p83 = por %p81, %p82
      %s84 = ssub.s32 %s22, %s34
      %s85 = ssub.s32 %s23, %s30
      %s86 = sor.u32 %s84, %s85
      %p87 = scmp.eq.s32.totalorder %s86, 0
      %s89 = sadd.s32 %s88, 1
      %s90 = scalar_select %p87, %s88, %s89
      %p93 = pneg %p87
      %p94 = scmp.eq.s32.totalorder %s15, 1
      %p95 = por %p93, %p94
      %p96 = scmp.ne.s32.totalorder %s88, %s91
      %p97 = scmp.eq.s32.totalorder %s15, 0
      %p98 = por %p96, %p97
      %p99 = scmp.ne.s32.totalorder %s88, %s91
      %p100 = scmp.eq.s32.totalorder %s20, 1
      %p101 = por %p99, %p100
      %p102 = scmp.ne.s32.totalorder %s91, %s92
      %p103 = scmp.eq.s32.totalorder %s20, 0
      %p104 = por %p102, %p103
      %p105 = scmp.ne.s32.totalorder %s91, %s92
      %p106 = scmp.eq.s32.totalorder %s21, 1
      %p107 = por %p105, %p106
      %p109 = scmp.ne.s32.totalorder %s92, %s108
      %p110 = scmp.eq.s32.totalorder %s21, 0
      %p111 = por %p109, %p110
      %p112 = scmp.le.s32.totalorder 1, %s15
      %p113 = scmp.lt.s32.totalorder %s15, 3
      %p114 = pnand %p112, %p113
      %p115 = pneg %p114
      // Predicated region
      $region9: #{tpu_custom_call.1} parent=5 // pred_check
        _
      $region10: #{tpu_custom_call.1} parent=5 // pred_check_branch
        %117 = sbr.rel (%p114) target = $region12
      $region11: #{tpu_custom_call.1} parent=5 // pred_region
        %s118 = ssub.s32 %s15, 1
        // Predicated region
        $region13: #{tpu_custom_call.1} parent=11 // pred_check
          %p119 = pneg %p76
        $region14: #{tpu_custom_call.1} parent=11 // pred_check_branch
          %121 = sbr.rel (%p119) target = $region16
        $region15: #{tpu_custom_call.1} parent=11 // pred_region
          %s123 = ssub.s32 256, 256
          %124 = vsyncadd [#allocation6], %s123
          %s125 = sshll.u32 [#allocation5], 4
          %s126 = int_to_ptr.vmem [resolvable:$true] %s125
          %131 = dma.hbm_to_vmem [thread:$0]  %s1, 256, %s126, [#allocation6], 64, 64, 4
        $region16: #{tpu_custom_call.1} parent=11 // pred_fallthru
          _
      $region12: #{tpu_custom_call.1} parent=5 // pred_fallthru
        _
      %p132 = scmp.lt.s32.totalorder %s15, 2
      // Predicated region
      $region17: #{tpu_custom_call.1} parent=5 // pred_check
        %p133 = pneg %p132
      $region18: #{tpu_custom_call.1} parent=5 // pred_check_branch
        %135 = sbr.rel (%p133) target = $region20
      $region19: #{tpu_custom_call.1} parent=5 // pred_region
        // Predicated region
        $region21: #{tpu_custom_call.1} parent=19 // pred_check
          %p136 = pneg %p49
        $region22: #{tpu_custom_call.1} parent=19 // pred_check_branch
          %138 = sbr.rel (%p136) target = $region24
        $region23: #{tpu_custom_call.1} parent=19 // pred_region
          %s139 = sand.u32 %s39, 1
          %s140 = scalar_lea.sflag [#allocation3], %s139
          %s141 = sand.u32 %s39, 1
          %s142 = smul.addr %s141, 8
          %s143 = scalar_lea.vmem [#allocation2], %s142
          %s144 = smul.u32 2, %s23
          %s146 = ssub.s32 128, 128
          %147 = vsyncadd %s140, %s146
          %s148 = smul.addr %s22, 2
          %s149 = sadd.s32 %s144, %s148
          %s150 = smul.addr %s149, 64
          %s151 = scalar_lea.hbm %s0, %s150
          %s152 = sshll.u32 %s143, 4
          %s153 = int_to_ptr.vmem [resolvable:$true] %s152
          %158 = dma.hbm_to_vmem [thread:$0]  %s151, 128, %s153, %s140, 64, 64, 4
        $region24: #{tpu_custom_call.1} parent=19 // pred_fallthru
          _
      $region20: #{tpu_custom_call.1} parent=5 // pred_fallthru
        _
      %p159 = scmp.le.s32.totalorder 1, %s15
      %p160 = scmp.lt.s32.totalorder %s15, 3
      %p161 = pnand %p159, %p160
      %p162 = pneg %p161
      // Predicated region
      $region25: #{tpu_custom_call.1} parent=5 // pred_check
        _
      $region26: #{tpu_custom_call.1} parent=5 // pred_check_branch
        %164 = sbr.rel (%p161) target = $region28
      $region27: #{tpu_custom_call.1} parent=5 // pred_region
        %s165 = ssub.s32 %s15, 1
        %s166 = sand.u32 %s42, 1
        %s167 = scalar_lea.sflag [#allocation3], %s166
        %s168 = sand.u32 %s42, 1
        %s169 = smul.addr %s168, 8
        %s170 = scalar_lea.vmem [#allocation2], %s169
        // Predicated region
        $region29: #{tpu_custom_call.1} parent=27 // pred_check
          %p171 = pneg %p55
        $region30: #{tpu_custom_call.1} parent=27 // pred_check_branch
          %173 = sbr.rel (%p171) target = $region32
        $region31: #{tpu_custom_call.1} parent=27 // pred_region
          %174 = dma.done %s167, 128
        $region32: #{tpu_custom_call.1} parent=27 // pred_fallthru
          _
        // Predicated region
        $region33: #{tpu_custom_call.1} parent=27 // pred_check
          %p175 = pneg %p76
        $region34: #{tpu_custom_call.1} parent=27 // pred_check_branch
          %177 = sbr.rel (%p175) target = $region36
        $region35: #{tpu_custom_call.1} parent=27 // pred_region
          %178 = dma.done [#allocation6], 256
        $region36: #{tpu_custom_call.1} parent=27 // pred_fallthru
          _
        %s179 = sand.u32 %s42, 1
        %s180 = scalar_lea.sflag [#allocation3], %s179
        %s181 = sand.u32 %s42, 1
        %s182 = smul.addr %s181, 8
        %s183 = scalar_lea.vmem [#allocation2], %s182
        %p184 = pneg %p55
        %p185 = pneg %p52
        %p186 = pneg %p76
        %p187 = pneg %p73
        %p188 = pneg %p104
        %p189 = pneg %p101
        %s190 = sand.u32 %s91, 1
        %s191 = scalar_lea.sflag [#allocation4], %s190
        %s192 = sand.u32 %s91, 1
        %s193 = smul.addr %s192, 16
        %s194 = scalar_lea.vmem [#allocation7], %s193
        %s195 = smul.u32 2, %s25
        %s196 = smul.u32 2, %s25
        %v198 = vld [vmem:[%s170] sm:$0xf]
        %v199 = vld [vmem:[%s170 + $0x4] sm:$0xf]
        %v200 = vld [vmem:[#allocation5] sm:$0xf]
        %v201 = vld [vmem:[#allocation5 + $0x4] sm:$0xf]
        %v202 = vld [vmem:[#allocation5 + $0x8] sm:$0xf]
        %v203 = vld [vmem:[#allocation5 + $0xc] sm:$0xf]
        %v206 = vunpack.c.l.b16 %v198
        %v207 = vunpack.c.l.b16 %v199
        %v208 = vpack.c.b16 %v207, %v206
        %v213 = vunpack.c.l.b16 %v200
        %v214 = vunpack.c.l.b16 %v201
        %v215 = vunpack.c.l.b16 %v202
        %v216 = vunpack.c.l.b16 %v203
        %v217 = vpack.c.b16 %v214, %v213
        %v218 = vpack.c.b16 %v216, %v215
        %vm221 = vcmask 261120
        %v223 = vsel %vm221, %v208, 0
        %225 = vmatprep.subr.bf16.mxu0 0
        %226 = vmatpush1.bf16.msra.mxu0 0
        %227 = vmatprep.subr.bf16.mxu0 0
        %228 = vmatpush1.bf16.msra.mxu0 0
        %229 = vmatprep.subr.bf16.mxu0 0
        %230 = vmatpush1.bf16.msra.mxu0 0
        %231 = vmatprep.subr.bf16.mxu0 0
        %232 = vmatpush1.bf16.msra.mxu0 0
        %233 = vmatprep.subr.bf16.mxu0 0
        %234 = vmatpush1.bf16.msra.mxu0 0
        %235 = vmatprep.subr.bf16.mxu0 0
        %236 = vmatpush1.bf16.msra.mxu0 0
        %237 = vmatprep.subr.bf16.mxu0 0
        %238 = vmatpush1.bf16.msra.mxu0 %v218
        %239 = vmatprep.subr.bf16.mxu0 0
        %240 = vmatpush1.bf16.msra.mxu0 %v217
        %241 = vmatprep.subr.bf16.mxu0 0
        %242 = vmatpush2.bf16.msra.mxu0 0
        %243 = vmatprep.subr.bf16.mxu0 0
        %244 = vmatpush2.bf16.msra.mxu0 0
        %245 = vmatprep.subr.bf16.mxu0 0
        %246 = vmatpush2.bf16.msra.mxu0 0
        %247 = vmatprep.subr.bf16.mxu0 0
        %248 = vmatpush2.bf16.msra.mxu0 0
        %249 = vmatprep.subr.bf16.mxu0 0
        %250 = vmatpush2.bf16.msra.mxu0 0
        %251 = vmatprep.subr.bf16.mxu0 0
        %252 = vmatpush2.bf16.msra.mxu0 0
        %253 = vmatprep.subr.bf16.mxu0 0
        %254 = vmatpush2.bf16.msra.mxu0 0
        %255 = vmatprep.subr.bf16.mxu0 0
        %256 = vmatpush2.bf16.msra.mxu0 0
        %257 = vmatprep.mubr.bf16.mxu0 0
        %258 = vmatmul.mubr.bf16.gmra.mxu0 %v223
        %v259 = vpop.f32.mrf.mxu0
        %v260 = vadd.f32 0.0, %v259
        %v261 = vpop.f32.mrf.mxu0
        %v262 = vpop.f32.mrf.mxu0
        %v263 = vadd.f32 0.0, %v262
        %v264 = vpop.f32.mrf.mxu0
        %265 = vdwg.mxu0
        %v266 = vmul.f32 %v260, 0.25
        %v267 = vmul.f32 %v263, 0.25
        %v268 = vpack.c.bf16 %v267, %v266
        %v270 = vunpack.c.l.b16 %v268
        %v271 = vunpack.c.h.b16 %v268
        %v272 = vpack.c.b16 %v270, %v270
        %v273 = vpack.c.b16 %v271, %v271
        %vm276 = vcmask 125952
        %277 = vst.msk [vmem:[%s194] sm:$0xf] %vm276, %v272
        %278 = vst.msk [vmem:[%s194 + $0x4] sm:$0xf] %vm276, %v273
        %279 = vrot.lane.b32.xlu0 %v272, 112
        %v280 = vpop.permute.xlu0 %279
        %281 = vrot.lane.b32.xlu0 %v273, 112
        %v282 = vpop.permute.xlu0 %281
        %s285 = scalar_lea.vmem %s194, 8 [#allocation7]
        %286 = vst.msk [vmem:[%s285] sm:$0xf] %vm276, %v280
        %287 = vst.msk [vmem:[%s285 + $0x4] sm:$0xf] %vm276, %v282
        %s288 = sand.u32 %s91, 1
        %s289 = scalar_lea.sflag [#allocation4], %s288
        %s290 = sand.u32 %s91, 1
        %s291 = smul.addr %s290, 16
        %s292 = scalar_lea.vmem [#allocation7], %s291
        // Predicated region
        $region37: #{tpu_custom_call.1} parent=27 // pred_check
          %p293 = pneg %p101
        $region38: #{tpu_custom_call.1} parent=27 // pred_check_branch
          %295 = sbr.rel (%p293) target = $region40
        $region39: #{tpu_custom_call.1} parent=27 // pred_region
          %s296 = smul.u32 2, %s25
          %s298 = ssub.s32 256, 256
          %299 = vsyncadd %s289, %s298
          %s300 = smul.addr %s24, 4
          %s301 = sadd.s32 %s296, %s300
          %s302 = smul.addr %s301, 64
          %s303 = scalar_lea.hbm %s2, %s302
          %s304 = sshll.u32 %s292, 4
          %s305 = int_to_ptr.vmem [resolvable:$true] %s304
          %310 = dma.vmem_to_hbm [thread:$0]  %s305, 256, %s303, %s289, 64, 64, 4
        $region40: #{tpu_custom_call.1} parent=27 // pred_fallthru
          _
      $region28: #{tpu_custom_call.1} parent=5 // pred_fallthru
        _
      %p311 = scmp.le.s32.totalorder 2, %s15
      // Predicated region
      $region41: #{tpu_custom_call.1} parent=5 // pred_check
        %p312 = pneg %p311
      $region42: #{tpu_custom_call.1} parent=5 // pred_check_branch
        %314 = sbr.rel (%p312) target = $region44
      $region43: #{tpu_custom_call.1} parent=5 // pred_region
        %s315 = ssub.s32 %s15, 2
        // Predicated region
        $region45: #{tpu_custom_call.1} parent=43 // pred_check
          %p316 = pneg %p107
        $region46: #{tpu_custom_call.1} parent=43 // pred_check_branch
          %318 = sbr.rel (%p316) target = $region48
        $region47: #{tpu_custom_call.1} parent=43 // pred_region
          %s319 = sand.u32 %s92, 1
          %s320 = scalar_lea.sflag [#allocation4], %s319
          %s321 = sand.u32 %s92, 1
          %s322 = smul.addr %s321, 16
          %s323 = scalar_lea.vmem [#allocation7], %s322
          %324 = dma.done %s320, 256
        $region48: #{tpu_custom_call.1} parent=43 // pred_fallthru
          _
      $region44: #{tpu_custom_call.1} parent=5 // pred_fallthru
        _
    $region6: #{tpu_custom_call.1} parent=1 // loop_footer
      %s19 = sadd.s32 1, %s15
    $region7: #{tpu_custom_call.1} parent=1 // loop_footer_branch
      %14 = sbr.rel target = $region3
    $region8: #{tpu_custom_call.1} parent=1 // loop_exit
      _
    %325 = vsyncpa [#allocation3], 1
    %s326 = scalar_lea.sflag [#allocation3], 1
    %327 = vsyncpa %s326, 1
    %328 = vsyncpa [#allocation6], 1
    %329 = vsyncpa [#allocation4], 1
    %s330 = scalar_lea.sflag [#allocation4], 1
    %331 = vsyncpa %s330, 1

</llo_original>
